<compile_context>
chip_gen: v7x
topology: tpu7x:2x2x1
jax: 0.10.0
libtpu: 0.0.40
codegen_flags: <defaults>
</compile_context>

<pallas_src>
import math

import jax
import jax.numpy as jnp
from jax import lax
from jax.experimental import pallas as pl
from jax.experimental.pallas import tpu as pltpu


# ----------------------------------------------------------------------------
# helpers
# ----------------------------------------------------------------------------
def _round_up(x, m):
    return ((x + m - 1) // m) * m


def _largest_divisor(n, limit):
    for d in range(min(limit, n), 0, -1):
        if n % d == 0:
            return d
    return n


def _vmem_capacity_bytes():
    """Per-core VMEM capacity; conservative (v7x, 64 MiB) fallback."""
    try:
        cap = int(getattr(pltpu.get_tpu_info(), "vmem_capacity_bytes", 0))
        if cap > 0:
            return cap
    except Exception:
        pass
    return 64 << 20


def _batch_block(B):
    """>=2 batch blocks let the 'parallel' axis shard the recurrence across the two
    v7x TensorCores; blocks stay 8-row aligned for (8,128) tiling."""
    if B >= 16 and B % 16 == 0:
        return B // 2
    return B


# ----------------------------------------------------------------------------
# Pallas kernel 1: hoisted input projection  (T*B, D) x (D, 4H) + b  -> bf16 (T*B, 4H)
# ----------------------------------------------------------------------------
def _proj_kernel(x_ref, w_ref, b_ref, o_ref):
    x = x_ref[...].astype(w_ref.dtype)                       # bf16 rows
    o_ref[...] = (jnp.dot(x, w_ref[...], preferred_element_type=jnp.float32)
                  + b_ref[...]).astype(o_ref.dtype)          # bf16 store: halves HBM traffic


def input_projection_pallas(x_tm, w_ih_t, b, vmem_cap):
    """x_tm: (T, B, D) time-major; w_ih_t: (D, 4H) bf16; b: (1, 4H) f32 -> (T, B, 4H) bf16."""
    T, B, D = x_tm.shape
    G = w_ih_t.shape[-1]
    M = T * B
    x2d = x_tm.reshape(M, D)                                 # contiguous, free XLA reshape
    x_item = jnp.dtype(x2d.dtype).itemsize

    # Row block derived from the VMEM budget (double-buffered x + bf16 out blocks
    # plus the resident bf16 weight); pad rows instead of falling back to one giant block.
    budget = int(vmem_cap * 0.35)
    resident = D * G * 2 + G * 4
    per_row = 2 * (D * x_item + G * 2)
    bm = max((budget - resident) // per_row, 8)
    bm = max((min(int(bm), 1024) // 8) * 8, 8)
    if M <= bm:
        bm = _round_up(M, 8)
    M_pad = _round_up(M, bm)
    if M_pad != M:
        x2d = jnp.pad(x2d, ((0, M_pad - M), (0, 0)))

    vmem_limit = int(min(0.9 * vmem_cap,
                         max(1.5 * (resident + per_row * bm), 16 << 20)))
    ce = pl.CostEstimate(flops=2 * M_pad * D * G, transcendentals=0,
                         bytes_accessed=M_pad * D * x_item + D * G * 2 + M_pad * G * 2)

    xp2d = pl.pallas_call(
        _proj_kernel,
        out_shape=jax.ShapeDtypeStruct((M_pad, G), jnp.bfloat16),
        grid_spec=pltpu.PrefetchScalarGridSpec(
            num_scalar_prefetch=0,
            grid=(M_pad // bm,),
            in_specs=[
                pl.BlockSpec((bm, D), lambda i: (i, 0)),     # x rows
                pl.BlockSpec((D, G), lambda i: (0, 0)),      # W_ih^T resident (bf16)
                pl.BlockSpec((1, G), lambda i: (0, 0)),      # fused bias (f32)
            ],
            out_specs=pl.BlockSpec((bm, G), lambda i: (i, 0)),   # lane-dense 4H output
        ),
        compiler_params=pltpu.CompilerParams(
            dimension_semantics=("parallel",),
            vmem_limit_bytes=vmem_limit),
        cost_estimate=ce,
    )(x2d, w_ih_t, b)
    if M_pad != M:
        xp2d = xp2d[:M]
    return xp2d.reshape(T, B, G)


# ----------------------------------------------------------------------------
# Pallas kernel 2: LSTM recurrence over pre-projected gates (+ fused MaxPool).
# Grid = (batch blocks [parallel], time chunks [arbitrary/sequential]).
# ----------------------------------------------------------------------------
def _make_lstm_rec_kernel(Tt, H, pool_k, T_real, T_pad, unroll):
    padded = (T_pad != T_real)

    def kernel(xp_ref, whh_ref, h0_ref, c0_ref, y_ref, hn_ref, cn_ref, h_scr, c_scr):
        tc = pl.program_id(1)                        # time chunk index (sequential)

        @pl.when(tc == 0)
        def _():
            h_scr[...] = h0_ref[...].astype(jnp.bfloat16)    # bf16 h carry
            c_scr[...] = c0_ref[...].astype(jnp.float32)     # f32 c carry

        whh = whh_ref[...]                                   # (H, 4H) bf16, resident
        if padded:
            t_base = tc * Tt

        def step(t, carry):
            if pool_k == 1:
                h, c = carry
            else:
                h, c, rmax = carry
            gates = (xp_ref[t].astype(jnp.float32)
                     + jnp.dot(h, whh, preferred_element_type=jnp.float32))  # (B, 4H) f32
            # Gate columns permuted offline to [i, f, o, g]:
            # one sigmoid over 3H + one tanh over H per step.
            ifo = jax.nn.sigmoid(gates[:, :3 * H])
            g_g = jnp.tanh(gates[:, 3 * H:])
            c_new = ifo[:, H:2 * H] * c + ifo[:, :H] * g_g
            h_new = (ifo[:, 2 * H:3 * H] * jnp.tanh(c_new)).astype(h.dtype)  # bf16 carry
            if padded:      # mask padded tail timesteps so h/c stay correct
                valid = (t_base + t) < T_real
                h_new = jnp.where(valid, h_new, h)
                c_new = jnp.where(valid, c_new, c)
            if pool_k == 1:
                y_ref[t] = h_new.astype(y_ref.dtype)
                return h_new, c_new
            # Fused stride==kernel MaxPool: running max; last write per window wins.
            rmax = jnp.where((t % pool_k) == 0, h_new, jnp.maximum(rmax, h_new))
            y_ref[t // pool_k] = rmax.astype(y_ref.dtype)
            return h_new, c_new, rmax

        if pool_k == 1:
            carry0 = (h_scr[...], c_scr[...])
        else:
            carry0 = (h_scr[...], c_scr[...], jnp.zeros(h_scr.shape, jnp.bfloat16))
        carry = lax.fori_loop(0, Tt, step, carry0, unroll=unroll)
        h_fin, c_fin = carry[0], carry[1]
        h_scr[...] = h_fin
        c_scr[...] = c_fin

        # Final hidden/cell written once, on the last (sequential) time chunk only.
        @pl.when(tc == pl.num_programs(1) - 1)
        def _():
            hn_ref[...] = h_fin.astype(hn_ref.dtype)
            cn_ref[...] = c_fin.astype(cn_ref.dtype)

    return kernel


def lstm_layer_tm_pallas(x_tm, h0, c0, w_ih_t, w_hh_t, b, pool_k=1, vmem_cap=None):
    """Time-major single-layer LSTM with optional fused stride==kernel MaxPool.

    x_tm: (T, B, D); h0/c0: (B, H) f32; w_ih_t: (D, 4H) bf16 (gate order [i,f,o,g]);
    w_hh_t: (H, 4H) bf16; b: (1, 4H) f32 (b_ih + b_hh fused).
    Returns y_tm (T//pool_k, B, H) bf16, h_n (B, H) f32, c_n (B, H) f32.
    """
    if vmem_cap is None:
        vmem_cap = _vmem_capacity_bytes()
    T, B, D = x_tm.shape
    H = h0.shape[-1]
    Bb = _batch_block(B)

    # --- time chunk derived from the VMEM budget (double-buffered bf16 xp + bf16 y)
    budget = int(vmem_cap * 0.35)
    per_t = 2 * Bb * 4 * H * 2 + (2 * Bb * H * 2) // max(pool_k, 1)
    Tt = max(int(budget // max(per_t, 1)), 1)
    Tt = min(Tt, 128)                                   # bound chunk length / unroll work
    Tt = max(pool_k, (Tt // pool_k) * pool_k)           # pool windows never span chunks
    Tt = min(Tt, _round_up(T, pool_k))
    T_pad = _round_up(T, Tt)
    if T_pad != T:   # pad + in-kernel masking instead of collapsing Tt to a divisor
        x_tm = jnp.pad(x_tm, ((0, T_pad - T), (0, 0), (0, 0)))

    # 1) hoisted input projection (one big lane-dense GEMM, bf16 output)
    xp_tm = input_projection_pallas(x_tm, w_ih_t, b, vmem_cap)     # (T_pad, B, 4H) bf16

    # 2) sequential recurrence, batch-parallel x time-chunked grid
    Tt_out = Tt // pool_k
    T_out_pad = T_pad // pool_k
    T_out = T // pool_k if pool_k > 1 else T
    unroll = min(Tt, 8)                                 # cap unroll: bound vreg live ranges

    xp_blk = Tt * Bb * 4 * H * 2
    y_blk = Tt_out * Bb * H * 2
    whh_bytes = H * 4 * H * 2
    small = Bb * H * 4 * 4 + Bb * H * 6
    vmem_limit = int(min(0.9 * vmem_cap,
                         max(1.5 * (2 * (xp_blk + y_blk) + 2 * whh_bytes + 2 * small),
                             16 << 20)))

    kernel = _make_lstm_rec_kernel(Tt, H, pool_k, T, T_pad, unroll)
    y_tm, hn, cn = pl.pallas_call(
        kernel,
        out_shape=(jax.ShapeDtypeStruct((T_out_pad, B, H), jnp.bfloat16),
                   jax.ShapeDtypeStruct((B, H), jnp.float32),
                   jax.ShapeDtypeStruct((B, H), jnp.float32)),
        grid_spec=pltpu.PrefetchScalarGridSpec(
            num_scalar_prefetch=0,
            grid=(B // Bb, T_pad // Tt),
            in_specs=[
                pl.BlockSpec((Tt, Bb, 4 * H), lambda bb, t: (t, bb, 0)),   # xp chunk (bf16)
                pl.BlockSpec((H, 4 * H), lambda bb, t: (0, 0)),            # W_hh^T resident
                pl.BlockSpec((Bb, H), lambda bb, t: (bb, 0)),              # h0
                pl.BlockSpec((Bb, H), lambda bb, t: (bb, 0)),              # c0
            ],
            out_specs=[
                pl.BlockSpec((Tt_out, Bb, H), lambda bb, t: (t, bb, 0)),   # (pooled) y chunk
                pl.BlockSpec((Bb, H), lambda bb, t: (bb, 0)),              # h_n (resident)
                pl.BlockSpec((Bb, H), lambda bb, t: (bb, 0)),              # c_n (resident)
            ],
            scratch_shapes=[pltpu.VMEM((Bb, H), jnp.bfloat16),             # h carry
                            pltpu.VMEM((Bb, H), jnp.float32)]),            # c carry
        compiler_params=pltpu.CompilerParams(
            dimension_semantics=("parallel", "arbitrary"),
            vmem_limit_bytes=vmem_limit),
    )(xp_tm, w_hh_t, h0, c0)
    if T_out_pad != T_out:
        y_tm = y_tm[:T_out]
    return y_tm, hn, cn


# ----------------------------------------------------------------------------
# Pallas kernel 3: standalone MaxPool1d over time (only used when stride != kernel;
# the stride == kernel case is fused into the recurrence above).
# ----------------------------------------------------------------------------
def maxpool1d_time_tm_pallas(x_tm, kernel_size, stride, window_block=16):
    # TODO(synk): overlapping windows keep the full sequence resident in VMEM here;
    # for very long T switch to a manual-DMA (memory_space=pl.ANY) gather of windows.
    T, B, H = x_tm.shape
    T_out = (T - kernel_size) // stride + 1
    Tw = _largest_divisor(T_out, window_block)           # output windows per grid step

    def _pool_kernel(x_ref, o_ref):
        tb = pl.program_id(0)

        def body(j, _):
            start = (tb * Tw + j) * stride
            o_ref[j] = jnp.max(x_ref[pl.ds(start, kernel_size)], axis=0)
            return 0

        lax.fori_loop(0, Tw, body, 0, unroll=True)

    return pl.pallas_call(
        _pool_kernel,
        out_shape=jax.ShapeDtypeStruct((T_out, B, H), x_tm.dtype),
        grid_spec=pltpu.PrefetchScalarGridSpec(
            num_scalar_prefetch=0,
            grid=(T_out // Tw,),
            in_specs=[pl.BlockSpec((T, B, H), lambda t: (0, 0, 0))],
            out_specs=pl.BlockSpec((Tw, B, H), lambda t: (t, 0, 0))),
        compiler_params=pltpu.CompilerParams(
            dimension_semantics=("arbitrary",)),
    )(x_tm)


# ----------------------------------------------------------------------------
# RNN_BLOCK equivalent: stack of 1-layer LSTMs, hidden chained layer-to-layer,
# MaxPool1d after a layer exactly like the PyTorch forward (fused when stride==kernel).
# ----------------------------------------------------------------------------
class RNNBlockPallas:
    def __init__(self, input_size, hidden_size, num_layers,
                 pooling_kernels, pooling_strides, key,
                 param_dtype=jnp.bfloat16):
        self.hidden_size = hidden_size
        self.pooling_kernels = list(pooling_kernels)
        self.pooling_strides = list(pooling_strides)
        self._vmem_cap = _vmem_capacity_bytes()
        self.layers = []
        d_in = input_size
        kscale = 1.0 / math.sqrt(hidden_size)

        def perm(w):   # PyTorch gate order [i, f, g, o] -> [i, f, o, g]
            i, f, g, o = jnp.split(w, 4, axis=0)
            return jnp.concatenate([i, f, o, g], axis=0)

        for _ in range(num_layers):
            key, k1, k2, k3, k4 = jax.random.split(key, 5)
            w_ih = jax.random.uniform(k1, (4 * hidden_size, d_in), jnp.float32, -kscale, kscale)
            w_hh = jax.random.uniform(k2, (4 * hidden_size, hidden_size), jnp.float32, -kscale, kscale)
            b_ih = jax.random.uniform(k3, (4 * hidden_size,), jnp.float32, -kscale, kscale)
            b_hh = jax.random.uniform(k4, (4 * hidden_size,), jnp.float32, -kscale, kscale)
            # Permuted gate order, transposed for (rows, 4H) matmuls, weights in bf16
            # (f32 accumulation in-kernel), biases fused and kept in f32.
            self.layers.append((perm(w_ih).T.astype(param_dtype),
                                perm(w_hh).T.astype(param_dtype),
                                perm(b_ih + b_hh)[None, :]))
            d_in = hidden_size
        # TODO(synk): dropout / WeightDrop / recurrent batch-norm paths not implemented
        # (defaults in the reference module disable them).

    def __call__(self, x, hidden=None):
        B = x.shape[0]
        H = self.hidden_size
        if hidden is None:
            h = jnp.zeros((B, H), jnp.float32)
            c = jnp.zeros((B, H), jnp.float32)
        else:
            h0, c0 = hidden                      # each (1, B, H), like nn.LSTM
            h, c = h0[0].astype(jnp.float32), c0[0].astype(jnp.float32)
        x_tm = jnp.transpose(x, (1, 0, 2))       # batch-first -> time-major, once
        for i, (w_ih_t, w_hh_t, b) in enumerate(self.layers):
            pool_k = pool_s = None
            if i < len(self.pooling_kernels):
                pool_k, pool_s = self.pooling_kernels[i], self.pooling_strides[i]
            fused = pool_k is not None and pool_k == pool_s
            x_tm, h, c = lstm_layer_tm_pallas(
                x_tm, h, c, w_ih_t, w_hh_t, b,
                pool_k=pool_k if fused else 1, vmem_cap=self._vmem_cap)
            if pool_k is not None and not fused:
                x_tm = maxpool1d_time_tm_pallas(x_tm, pool_k, pool_s)
        y = jnp.transpose(x_tm, (1, 0, 2)).astype(x.dtype)
        return y, (h[None], c[None])


# ----------------------------------------------------------------------------
# Pure-JAX reference (mirrors the bf16-weight / bf16-xp / bf16-h, f32-accumulate math)
# ----------------------------------------------------------------------------
def _lstm_ref_tm(x_tm, h0, c0, w_ih_t, w_hh_t, b):
    T, B, D = x_tm.shape
    H = h0.shape[-1]
    xp = (jnp.dot(x_tm.reshape(T * B, D).astype(w_ih_t.dtype), w_ih_t,
                  preferred_element_type=jnp.float32) + b
          ).astype(jnp.bfloat16).reshape(T, B, -1)

    def step(carry, xp_t):
        h, c = carry
        gates = xp_t.astype(jnp.float32) + jnp.dot(h, w_hh_t,
                                                   preferred_element_type=jnp.float32)
        i = jax.nn.sigmoid(gates[:, :H])
        f = jax.nn.sigmoid(gates[:, H:2 * H])
        o = jax.nn.sigmoid(gates[:, 2 * H:3 * H])
        g = jnp.tanh(gates[:, 3 * H:])
        c = f * c + i * g
        h = (o * jnp.tanh(c)).astype(jnp.bfloat16)
        return (h, c), h

    (hn, cn), ys = lax.scan(step, (h0.astype(jnp.bfloat16), c0.astype(jnp.float32)), xp)
    return ys, hn.astype(jnp.float32), cn.astype(jnp.float32)


def _maxpool_ref_tm(x_tm, k, s):
    T = x_tm.shape[0]
    T_out = (T - k) // s + 1
    return jnp.stack([jnp.max(x_tm[t * s:t * s + k], axis=0)
                      for t in range(T_out)], axis=0)


def _block_ref(block, x, hidden):
    h, c = hidden[0][0], hidden[1][0]
    x_tm = jnp.transpose(x, (1, 0, 2))
    for i, (w_ih_t, w_hh_t, b) in enumerate(block.layers):
        x_tm, h, c = _lstm_ref_tm(x_tm, h, c, w_ih_t, w_hh_t, b)
        if i < len(block.pooling_kernels):
            x_tm = _maxpool_ref_tm(x_tm, block.pooling_kernels[i],
                                   block.pooling_strides[i])
    return (jnp.transpose(x_tm, (1, 0, 2)).astype(x.dtype),
            (h[None].astype(jnp.float32), c[None].astype(jnp.float32)))


if __name__ == "__main__":
    key = jax.random.PRNGKey(0)
    B, T, D_IN, H, NUM_LAYERS = 2, 8, 16, 32, 2
    POOL_K, POOL_S = [2], [2]          # pooling after first layer only

    k_param, k_x, k_h, k_c = jax.random.split(key, 4)
    block = RNNBlockPallas(D_IN, H, NUM_LAYERS, POOL_K, POOL_S, k_param)

    x = jax.random.normal(k_x, (B, T, D_IN), jnp.float32)
    h0 = jax.random.normal(k_h, (1, B, H), jnp.float32)
    c0 = jax.random.normal(k_c, (1, B, H), jnp.float32)

    y, (hn, cn) = block(x, (h0, c0))
    jax.block_until_ready((y, hn, cn))

    y_ref, (hn_ref, cn_ref) = _block_ref(block, x, (h0, c0))
    assert y.shape == (B, T // POOL_S[0], H), y.shape
    # bf16 xp / bf16 h-carry design -> validate at bf16-level tolerance.
    assert jnp.allclose(y, y_ref, atol=5e-2, rtol=5e-2), "output mismatch"
    assert jnp.allclose(hn, hn_ref, atol=5e-2, rtol=5e-2), "h_n mismatch"
    assert jnp.allclose(cn, cn_ref, atol=5e-2, rtol=5e-2), "c_n mismatch"

    print("KERNEL_OK")
</pallas_src>

<mosaic_0001>
module attributes {stable_mosaic.version = 11 : i64} {
  func.func @_proj_kernel(%arg0: i32, %arg1: memref<16x16xf32, #tpu.memory_space<vmem>>, %arg2: memref<16x128xbf16, #tpu.memory_space<vmem>>, %arg3: memref<1x128xf32, #tpu.memory_space<vmem>>, %arg4: memref<16x128xbf16, #tpu.memory_space<vmem>>) attributes {dimension_semantics = [#tpu.dimension_semantics<parallel>], iteration_bounds = array<i64: 1>, scalar_prefetch = 0 : i64, scratch_operands = 0 : i64, tpu.core_type = #tpu.core_type<tc>, window_params = [{transform_indices = @transform_0, window_bounds = array<i64: 16, 16>}, {pipeline_mode = #tpu.pipeline_mode<synchronous>, transform_indices = @transform_1, window_bounds = array<i64: 16, 128>}, {pipeline_mode = #tpu.pipeline_mode<synchronous>, transform_indices = @transform_2, window_bounds = array<i64: 1, 128>}, {transform_indices = @transform_3, window_bounds = array<i64: 16, 128>}]} {
    %c0 = arith.constant 0 : index
    %c0_0 = arith.constant 0 : index
    %0 = vector.load %arg1[%c0, %c0_0] : memref<16x16xf32, #tpu.memory_space<vmem>>, vector<16x16xf32>
    %1 = arith.truncf %0 : vector<16x16xf32> to vector<16x16xbf16>
    %c0_1 = arith.constant 0 : index
    %c0_2 = arith.constant 0 : index
    %2 = vector.load %arg2[%c0_1, %c0_2] : memref<16x128xbf16, #tpu.memory_space<vmem>>, vector<16x128xbf16>
    %cst = arith.constant dense<0.000000e+00> : vector<16x128xf32>
    %3 = tpu.matmul %1, %2, %cst {dimension_numbers = #tpu.dot_dimension_numbers<[1], [0], [0], [1], [0, 0, 1, 1], [], []>} : vector<16x16xbf16>, vector<16x128xbf16>, vector<16x128xf32> -> vector<16x128xf32>
    %c0_3 = arith.constant 0 : index
    %c0_4 = arith.constant 0 : index
    %4 = vector.load %arg3[%c0_3, %c0_4] : memref<1x128xf32, #tpu.memory_space<vmem>>, vector<1x128xf32>
    %5 = vector.broadcast %4 : vector<1x128xf32> to vector<16x128xf32>
    %6 = arith.addf %3, %5 : vector<16x128xf32>
    %7 = arith.truncf %6 : vector<16x128xf32> to vector<16x128xbf16>
    %c0_5 = arith.constant 0 : index
    %c0_6 = arith.constant 0 : index
    %8 = vector.load %arg4[%c0_5, %c0_6] : memref<16x128xbf16, #tpu.memory_space<vmem>>, vector<16x128xbf16>
    tpu.vector_store %arg4[%c0_5, %c0_6], %7 {strides = array<i32>} : memref<16x128xbf16, #tpu.memory_space<vmem>>, vector<16x128xbf16>,
    return
  }
  func.func @transform_0(%arg0: i32) -> (i32, i32) {
    %c0_i32 = arith.constant 0 : i32
    %c0_i32_0 = arith.constant 0 : i32
    return %arg0, %c0_i32 : i32, i32
  }
  func.func @transform_1(%arg0: i32) -> (i32, i32) {
    %c0_i32 = arith.constant 0 : i32
    %c0_i32_0 = arith.constant 0 : i32
    %c0_i32_1 = arith.constant 0 : i32
    return %c0_i32, %c0_i32_0 : i32, i32
  }
  func.func @transform_2(%arg0: i32) -> (i32, i32) {
    %c0_i32 = arith.constant 0 : i32
    %c0_i32_0 = arith.constant 0 : i32
    %c0_i32_1 = arith.constant 0 : i32
    return %c0_i32, %c0_i32_0 : i32, i32
  }
  func.func @transform_3(%arg0: i32) -> (i32, i32) {
    %c0_i32 = arith.constant 0 : i32
    %c0_i32_0 = arith.constant 0 : i32
    return %arg0, %c0_i32 : i32, i32
  }
}

</mosaic_0001>

<llo_original>
// kernel: tpu_custom_call.1
$region0: #{tpu_custom_call.1}
  #allocation0 [shape = 'u32[]', space=smem, size = 0x4, offset = 0x4, fixed_abs, tag = 'smem constant byte address 0x4 - core index']
  #allocation1 [shape = 'u32[144,128]{1,0:T(1,128)}', space=vmem, size = 0x12000, scoped, tag = 'internal scratch']
  %s0 = inlined_call_operand.hbm [shape: f32[16,16], index: 0, kind: input, shape index: {}]
  %s1 = inlined_call_operand.hbm [shape: bf16[16,128], index: 1, kind: input, shape index: {}]
  %s2 = inlined_call_operand.vmem [shape: f32[1,128], index: 2, kind: input, shape index: {}]
  %s3 = inlined_call_operand.hbm [shape: bf16[16,128], index: 3, kind: output, shape index: {}]
  %s4 = sld [smem:[#allocation0]]
  $region30: #{tpu_custom_call.1} parent=0
    _
  %s6 = ssub.s32 1, %s4
  %s7 = scalar_select 0, %s6, %s4
  $region1: #{tpu_custom_call.1} parent=0
    #allocation2 [shape = 'u8[8192]{0}', space=vmem, size = 0x2000, scoped, tag = 'input window, operand 0, single buffered']
    #allocation3 [shape = 's32[1]{0}', space=sflag, size = 0x4, scoped, tag = 'scoped memory for tpu_custom_call.1']
    #allocation4 [shape = 's32[1]{0}', space=sflag, size = 0x4, scoped, tag = 'scoped memory for tpu_custom_call.1']
    #allocation5 [shape = 'u8[4096]{0}', space=vmem, size = 0x1000, scoped, tag = 'input window, operand 1, single buffered']
    #allocation6 [shape = 's32[1]{0}', space=sflag, size = 0x4, scoped, tag = 'scoped memory for tpu_custom_call.1']
    #allocation7 [shape = 'u8[4096]{0}', space=vmem, size = 0x1000, scoped, tag = 'output window, operand 0, single buffered']
    %8 = vsyncpa [#allocation3], 0
    %9 = vsyncpa [#allocation6], 0
    %10 = vsyncpa [#allocation4], 0
    // Predicated region
    $region2: #{tpu_custom_call.1} parent=1 // pred_check
      _
    $region3: #{tpu_custom_call.1} parent=1 // pred_check_branch
      %12 = sbr.rel (0) target = $region5
    $region4: #{tpu_custom_call.1} parent=1 // pred_region
      %s14 = ssub.s32 256, 256
      %15 = vsyncadd [#allocation3], %s14
      %s16 = sshll.u32 [#allocation2], 4
      %s17 = int_to_ptr.vmem [resolvable:$true] %s16
      %22 = dma.hbm_to_vmem [thread:$0]  %s0, 256, %s17, [#allocation3], 128, 128, 8
    $region5: #{tpu_custom_call.1} parent=1 // pred_fallthru
      _
    // Predicated region
    $region6: #{tpu_custom_call.1} parent=1 // pred_check
      _
    $region7: #{tpu_custom_call.1} parent=1 // pred_check_branch
      %24 = sbr.rel (0) target = $region9
    $region8: #{tpu_custom_call.1} parent=1 // pred_region
      %s26 = ssub.s32 128, 128
      %27 = vsyncadd [#allocation6], %s26
      %s28 = sshll.u32 [#allocation5], 4
      %s29 = int_to_ptr.vmem [resolvable:$true] %s28
      %34 = dma.hbm_to_vmem [thread:$0]  %s1, 128, %s29, [#allocation6], 64, 64, 4
    $region9: #{tpu_custom_call.1} parent=1 // pred_fallthru
      _
    // Predicated region
    $region10: #{tpu_custom_call.1} parent=1 // pred_check
      _
    $region11: #{tpu_custom_call.1} parent=1 // pred_check_branch
      %36 = sbr.rel (0) target = $region13
    $region12: #{tpu_custom_call.1} parent=1 // pred_region
      _
    $region13: #{tpu_custom_call.1} parent=1 // pred_fallthru
      _
    // Predicated region
    $region14: #{tpu_custom_call.1} parent=1 // pred_check
      _
    $region15: #{tpu_custom_call.1} parent=1 // pred_check_branch
      %38 = sbr.rel (0) target = $region17
    $region16: #{tpu_custom_call.1} parent=1 // pred_region
      %39 = dma.done [#allocation3], 256
    $region17: #{tpu_custom_call.1} parent=1 // pred_fallthru
      _
    // Predicated region
    $region18: #{tpu_custom_call.1} parent=1 // pred_check
      _
    $region19: #{tpu_custom_call.1} parent=1 // pred_check_branch
      %41 = sbr.rel (0) target = $region21
    $region20: #{tpu_custom_call.1} parent=1 // pred_region
      %42 = dma.done [#allocation6], 128
    $region21: #{tpu_custom_call.1} parent=1 // pred_fallthru
      _
    %v44 = vld [vmem:[#allocation2] sm:$0xff]
    %v45 = vld [vmem:[#allocation2 + $0x8] sm:$0xff]
    %v46 = vpack.c.bf16 %v45, %v44
    %v47 = vld [vmem:[#allocation5] sm:$0xf]
    %v48 = vld [vmem:[#allocation5 + $0x4] sm:$0xf]
    %v49 = vld [vmem:[%s2] sm:$0x1]
    %v51 = vlaneseq
    %v52 = vshrl.u32 %v51, 7
    %v53 = vsub.s32 0, %v52
    %v54 = vrot.slane %v49, %v53
    %v58 = vunpack.c.l.b16 %v47
    %v59 = vunpack.c.l.b16 %v48
    %v60 = vpack.c.b16 %v59, %v58
    %vm62 = vcmask 130048
    %v64 = vsel %vm62, %v46, 0
    %66 = vmatprep.subr.bf16.mxu0 0
    %67 = vmatpush1.bf16.msra.mxu0 %v60
    %68 = vmatprep.subr.bf16.mxu0 0
    %69 = vmatpush1.bf16.msra.mxu0 0
    %70 = vmatprep.subr.bf16.mxu0 0
    %71 = vmatpush1.bf16.msra.mxu0 0
    %72 = vmatprep.subr.bf16.mxu0 0
    %73 = vmatpush1.bf16.msra.mxu0 0
    %74 = vmatprep.subr.bf16.mxu0 0
    %75 = vmatpush1.bf16.msra.mxu0 0
    %76 = vmatprep.subr.bf16.mxu0 0
    %77 = vmatpush1.bf16.msra.mxu0 0
    %78 = vmatprep.subr.bf16.mxu0 0
    %79 = vmatpush1.bf16.msra.mxu0 0
    %80 = vmatprep.subr.bf16.mxu0 0
    %81 = vmatpush1.bf16.msra.mxu0 0
    %82 = vmatprep.subr.bf16.mxu0 0
    %83 = vmatpush1.bf16.msra.mxu0 0
    %84 = vmatprep.subr.bf16.mxu0 0
    %85 = vmatpush1.bf16.msra.mxu0 0
    %86 = vmatprep.subr.bf16.mxu0 0
    %87 = vmatpush1.bf16.msra.mxu0 0
    %88 = vmatprep.subr.bf16.mxu0 0
    %89 = vmatpush1.bf16.msra.mxu0 0
    %90 = vmatprep.subr.bf16.mxu0 0
    %91 = vmatpush1.bf16.msra.mxu0 0
    %92 = vmatprep.subr.bf16.mxu0 0
    %93 = vmatpush1.bf16.msra.mxu0 0
    %94 = vmatprep.subr.bf16.mxu0 0
    %95 = vmatpush1.bf16.msra.mxu0 0
    %96 = vmatprep.subr.bf16.mxu0 0
    %97 = vmatpush1.bf16.msra.mxu0 0
    %98 = vmatprep.mubr.bf16.mxu0 0
    %99 = vmatmul.mubr.bf16.gmra.mrb[0].mxu0 %v64
    %v100 = vpop.f32.mrb[0].mxu0
    %v101 = vadd.f32 %v54, %v100
    %v102 = vpop.f32.mrb[0].mxu0
    %v103 = vpop.f32.mrb[0].mxu0
    %v104 = vadd.f32 %v54, %v103
    %v105 = vpop.f32.mrb[0].mxu0
    %106 = vdwg.mxu0
    %v107 = vpack.c.bf16 %v104, %v101
    %v109 = vunpack.c.l.b16 %v107
    %v110 = vunpack.c.h.b16 %v107
    %v111 = vpack.c.b16 %v109, %v109
    %v112 = vpack.c.b16 %v110, %v110
    %115 = vst [vmem:[#allocation7] sm:$0xf] %v111
    %116 = vst [vmem:[#allocation7 + $0x4] sm:$0xf] %v112
    // Predicated region
    $region22: #{tpu_custom_call.1} parent=1 // pred_check
      _
    $region23: #{tpu_custom_call.1} parent=1 // pred_check_branch
      %118 = sbr.rel (0) target = $region25
    $region24: #{tpu_custom_call.1} parent=1 // pred_region
      %s120 = ssub.s32 128, 128
      %121 = vsyncadd [#allocation4], %s120
      %s122 = sshll.u32 [#allocation7], 4
      %s123 = int_to_ptr.vmem [resolvable:$true] %s122
      %128 = dma.vmem_to_hbm [thread:$0]  %s123, 128, %s3, [#allocation4], 64, 64, 4
    $region25: #{tpu_custom_call.1} parent=1 // pred_fallthru
      _
    // Predicated region
    $region26: #{tpu_custom_call.1} parent=1 // pred_check
      _
    $region27: #{tpu_custom_call.1} parent=1 // pred_check_branch
      %130 = sbr.rel (0) target = $region29
    $region28: #{tpu_custom_call.1} parent=1 // pred_region
      %131 = dma.done [#allocation4], 128
    $region29: #{tpu_custom_call.1} parent=1 // pred_fallthru
      _
    %132 = vsyncpa [#allocation3], 1
    %133 = vsyncpa [#allocation6], 1
    %134 = vsyncpa [#allocation4], 1

</llo_original>
